<compile_context>
chip_gen: v6e
topology: v6e:2x2x1
jax: 0.10.0
libtpu: 0.0.40
codegen_flags: <defaults>
</compile_context>

<pallas_src>
import functools
import math

import jax
import jax.numpy as jnp
from jax import lax
from jax.experimental import pallas as pl
from jax.experimental.pallas import tpu as pltpu

EPS = 1e-08
_SQRT2 = math.sqrt(2.0)
_MAX_TILE = 512  # multiple of 128; keeps per-tile f32 temporaries to a few MiB


def _erf_f32(x):
    """Bounded erf approximation (A&S 7.1.26), |abs err| <= 1.5e-7.

    Result is in [-1, 1] by construction, so p = 0.5*(1+erf) stays in [0, 1]
    and sqrt arguments stay >= EPS (the torch forward relies on this).  Uses
    only abs/mul/add/div/exp/where, all of which Mosaic lowers.
    """
    a1, a2, a3, a4, a5 = (0.254829592, -0.284496736, 1.421413741,
                          -1.453152027, 1.061405429)
    k = 0.3275911
    ax = jnp.abs(x)
    t = 1.0 / (1.0 + k * ax)
    poly = ((((a5 * t + a4) * t + a3) * t + a2) * t + a1) * t
    y = 1.0 - poly * jnp.exp(-ax * ax)
    return jnp.where(x < 0.0, -y, y)


def _l2r_tile_kernel(bi_ref, bj_ref, yp_col_ref, yp_row_ref, y_col_ref,
                     y_row_ref, out_ref, *, bz, nb, ragged):
    t = pl.program_id(0)
    bi = bi_ref[t]
    bj = bj_ref[t]

    tm = yp_col_ref.shape[0]
    tn = yp_row_ref.shape[1]

    yp_col = yp_col_ref[...]   # [tm, 1]
    yp_row = yp_row_ref[...]   # [1, tn]
    y_col = y_col_ref[...]     # [tm, 1]
    y_row = y_row_ref[...]     # [1, tn]

    preds = yp_col - yp_row    # [tm, tn]
    # g = 0.5*(sign(y_i - y_j) + 1) via direct compares (no gts temporary).
    g = jnp.where(y_col > y_row, 1.0,
                  jnp.where(y_col < y_row, 0.0, 0.5))
    # p = 0.5*(1 + erf(preds / (sqrt(2)*0.5))) == 0.5*(1 + erf(preds*sqrt(2))).
    p = 0.5 * (1.0 + _erf_f32(preds * _SQRT2))
    a = p * g + EPS
    b = (1.0 - p) * (1.0 - g) + EPS
    # sqrt(x) = x * rsqrt(x) (valid: x >= EPS > 0) -> sqrt work moves to the
    # EUP slot, leaving a single VALU multiply on the vector path.
    term = 1.0 - (a * lax.rsqrt(a) + b * lax.rsqrt(b))   # [tm, tn]

    def emit(partial_sum):
        # Lane-dense full-vreg store of the per-tile partial sum.
        out_ref[...] = jnp.full(out_ref.shape, partial_sum, jnp.float32)

    def full_diag_sum():
        # Full (non-ragged) diagonal tile: term(i,j) == term(j,i) and the
        # diagonal value is a compile-time constant, so the strict-upper sum
        # is (full_tile_sum - tm*diag_const) / 2 -- no iota mask, no selects.
        diag_const = 1.0 - 2.0 * math.sqrt(0.25 + EPS)
        return 0.5 * (jnp.sum(term) - tm * diag_const)

    is_diag = bi == bj

    if ragged:
        # Only tiles touching the ragged edge need per-element masking (the
        # padded region of the input blocks holds garbage that must be zeroed).
        is_edge = jnp.logical_or(bi == nb - 1, bj == nb - 1)

        @pl.when(is_edge)
        def _():
            grow = bi * tm + lax.broadcasted_iota(jnp.int32, (tm, tn), 0)
            gcol = bj * tn + lax.broadcasted_iota(jnp.int32, (tm, tn), 1)
            # (grow < gcol) & (gcol < bz) also implies grow < bz.
            valid = jnp.logical_and(grow < gcol, gcol < bz)
            emit(jnp.sum(jnp.where(valid, term, 0.0)))

        not_edge = jnp.logical_not(is_edge)

        @pl.when(jnp.logical_and(not_edge, is_diag))
        def _():
            emit(full_diag_sum())

        @pl.when(jnp.logical_and(not_edge, jnp.logical_not(is_diag)))
        def _():
            emit(jnp.sum(term))
    else:
        @pl.when(is_diag)
        def _():
            emit(full_diag_sum())

        @pl.when(jnp.logical_not(is_diag))
        def _():
            emit(jnp.sum(term))


def _pick_tile(bz, max_tile):
    if bz <= 256:
        # Single full-array tile (any bz is layout-legal when block == array).
        return bz
    # Multiple of 128 (so (tile,1)/(1,tile) blocks satisfy the (8,128) rule);
    # aim for >= ~4 row blocks so the flattened tile grid has enough entries
    # to keep both v7x TensorCores busy, capped so temporaries stay small.
    tile = 128 * max(1, math.ceil(math.ceil(bz / 4) / 128))
    return min(max_tile, tile)


def _pallas_loss(yp, yy, *, max_tile=_MAX_TILE):
    bz = yp.shape[0]
    tile = _pick_tile(bz, max_tile)
    nb = pl.cdiv(bz, tile)
    ragged = (bz % tile) != 0

    # Upper-triangle tile coordinates (including diagonal tiles), flattened.
    pairs = [(i, j) for i in range(nb) for j in range(i, nb)]
    n_tiles = len(pairs)
    bi_tbl = jnp.asarray([ij[0] for ij in pairs], jnp.int32)
    bj_tbl = jnp.asarray([ij[1] for ij in pairs], jnp.int32)

    yp_col = yp.reshape(bz, 1)
    yp_row = yp.reshape(1, bz)
    y_col = yy.reshape(bz, 1)
    y_row = yy.reshape(1, bz)

    kernel = functools.partial(_l2r_tile_kernel, bz=bz, nb=nb, ragged=ragged)

    partials = pl.pallas_call(
        kernel,
        out_shape=jax.ShapeDtypeStruct((n_tiles, 8, 128), jnp.float32),
        grid_spec=pltpu.PrefetchScalarGridSpec(
            num_scalar_prefetch=2,
            grid=(n_tiles,),
            in_specs=[
                pl.BlockSpec((tile, 1), lambda t, bi, bj: (bi[t], 0)),
                pl.BlockSpec((1, tile), lambda t, bi, bj: (0, bj[t])),
                pl.BlockSpec((tile, 1), lambda t, bi, bj: (bi[t], 0)),
                pl.BlockSpec((1, tile), lambda t, bi, bj: (0, bj[t])),
            ],
            out_specs=pl.BlockSpec((1, 8, 128), lambda t, bi, bj: (t, 0, 0)),
        ),
        compiler_params=pltpu.CompilerParams(
            dimension_semantics=("parallel",),
            vmem_limit_bytes=32 * 1024 * 1024),
        cost_estimate=pl.CostEstimate(
            flops=int(20 * bz * bz),
            transcendentals=int(1.5 * bz * bz) + 1,
            bytes_accessed=int(16 * bz + n_tiles * (8 * 128 * 4 + 8))),
    )(bi_tbl, bj_tbl, yp_col, yp_row, y_col, y_row)

    n_pairs = bz * (bz - 1) // 2
    total = jnp.sum(partials[:, 0, 0])
    return total / jnp.float32(n_pairs)


def _dense_loss(yp, yy):
    """Fused pure-JAX path for small batches (kernel launch overhead dominates)."""
    bz = yp.shape[0]
    preds = yp[:, None] - yp[None, :]
    g = jnp.where(yy[:, None] > yy[None, :], 1.0,
                  jnp.where(yy[:, None] < yy[None, :], 0.0, 0.5))
    # Clip: XLA's erf may overshoot +/-1 by a few ulp; torch's p is in [0,1].
    p = jnp.clip(0.5 * (1.0 + lax.erf(preds * _SQRT2)), 0.0, 1.0)
    term = 1.0 - (jnp.sqrt(p * g + EPS) + jnp.sqrt((1.0 - p) * (1.0 - g) + EPS))
    mask = jnp.arange(bz)[:, None] < jnp.arange(bz)[None, :]
    n_pairs = bz * (bz - 1) // 2   # bz == 1 -> 0/0 -> NaN, matching torch.mean
    return jnp.sum(jnp.where(mask, term, 0.0)) / jnp.float32(n_pairs)


def l2r_loss(y_pred, y, *, min_pallas_bz=1024, max_tile=_MAX_TILE):
    """y_pred: [bz, 1] (or [bz]) float, y: [bz] float -> scalar f32 loss.

    NOTE: bz == 1 has zero pairs -> NaN, matching torch.mean over an empty
    selection.
    """
    bz = y_pred.shape[0]
    yp = y_pred.reshape(bz).astype(jnp.float32)
    yy = y.reshape(bz).astype(jnp.float32)
    if bz < min_pallas_bz:
        return _dense_loss(yp, yy)
    return _pallas_loss(yp, yy, max_tile=max_tile)


def _ref_loss(y_pred, y):
    """Pure-JAX reference mirroring the PyTorch forward."""
    bz = y_pred.shape[0]
    yp = y_pred.reshape(bz).astype(jnp.float32)
    yy = y.reshape(bz).astype(jnp.float32)
    preds = yp[:, None] - yp[None, :]
    gts = yy[:, None] - yy[None, :]
    iu = jnp.triu_indices(bz, k=1)
    preds = preds[iu]
    gts = gts[iu]
    g = 0.5 * (jnp.sign(gts) + 1.0)
    c = jnp.sqrt(jnp.float32(2.0)) * 0.5
    # torch's erf is bounded in [-1, 1]; XLA's f32 erf can overshoot by a few
    # ulp which would make a sqrt argument negative -> NaN, so clip.
    p = jnp.clip(0.5 * (1.0 + lax.erf(preds / c)), 0.0, 1.0)
    return jnp.mean(1.0 - (jnp.sqrt(p * g + EPS)
                           + jnp.sqrt((1.0 - p) * (1.0 - g) + EPS)))


# TODO(synk): prediction_expectation (softmax-expectation helper) is unused by
# forward() and therefore not implemented here.

if __name__ == "__main__":
    key = jax.random.PRNGKey(0)

    # (bz, force_pallas):
    #   8    -> single-tile Pallas path (typical production batch, forced
    #           through the kernel so the kernel itself is exercised).
    #   640  -> multi-tile, ragged edge + full-diagonal + interior tiles.
    #   1024 -> multi-tile, non-ragged; also the default (non-forced) path.
    for bz, force_pallas in ((8, True), (640, True), (1024, False)):
        k1, k2 = jax.random.split(jax.random.fold_in(key, bz))
        # Scalar prediction per sample (e.g. expectation over EXIF levels).
        y_pred = jax.random.normal(k1, (bz, 1), dtype=jnp.float32) * 1.5 + 2.5
        # Ground-truth EXIF level numbers in {1, 2, 3, 4}.
        y = jax.random.randint(k2, (bz,), 1, 5).astype(jnp.float32)

        loss = jax.block_until_ready(
            l2r_loss(y_pred, y, min_pallas_bz=0 if force_pallas else 1024))
        ref = jax.block_until_ready(_ref_loss(y_pred, y))
        assert bool(jnp.isfinite(loss)), (bz, loss)
        assert jnp.allclose(loss, ref, atol=2e-4, rtol=2e-4), (bz, loss, ref)

        if bz == 8:
            # Default small-batch path (pure-JAX fallback) must agree too.
            loss_fb = jax.block_until_ready(l2r_loss(y_pred, y))
            assert jnp.allclose(loss_fb, ref, atol=2e-4, rtol=2e-4), (loss_fb, ref)

    print("KERNEL_OK")
</pallas_src>

<mosaic_0001>
module attributes {stable_mosaic.version = 11 : i64} {
  func.func @_l2r_tile_kernel(%arg0: i32, %arg1: memref<1xi32, #tpu.memory_space<smem>>, %arg2: memref<1xi32, #tpu.memory_space<smem>>, %arg3: memref<8x1xf32, #tpu.memory_space<vmem>>, %arg4: memref<1x8xf32, #tpu.memory_space<vmem>>, %arg5: memref<8x1xf32, #tpu.memory_space<vmem>>, %arg6: memref<1x8xf32, #tpu.memory_space<vmem>>, %arg7: memref<1x8x128xf32, #tpu.memory_space<vmem>>) attributes {dimension_semantics = [#tpu.dimension_semantics<parallel>], iteration_bounds = array<i64: 1>, scalar_prefetch = 2 : i64, scratch_operands = 0 : i64, tpu.core_type = #tpu.core_type<tc>, window_params = [{transform_indices = @transform_0, window_bounds = array<i64: 8, 1>}, {transform_indices = @transform_1, window_bounds = array<i64: 1, 8>}, {transform_indices = @transform_2, window_bounds = array<i64: 8, 1>}, {transform_indices = @transform_3, window_bounds = array<i64: 1, 8>}, {transform_indices = @transform_4, window_bounds = array<i64: 1, 8, 128>}]} {
    %0 = arith.index_cast %arg0 : i32 to index
    %1 = memref.load %arg1[%0] : memref<1xi32, #tpu.memory_space<smem>>
    %2 = arith.index_cast %arg0 : i32 to index
    %3 = memref.load %arg2[%2] : memref<1xi32, #tpu.memory_space<smem>>
    %c0 = arith.constant 0 : index
    %c0_0 = arith.constant 0 : index
    %4 = vector.load %arg3[%c0, %c0_0] : memref<8x1xf32, #tpu.memory_space<vmem>>, vector<8x1xf32>
    %c0_1 = arith.constant 0 : index
    %c0_2 = arith.constant 0 : index
    %5 = vector.load %arg4[%c0_1, %c0_2] : memref<1x8xf32, #tpu.memory_space<vmem>>, vector<1x8xf32>
    %c0_3 = arith.constant 0 : index
    %c0_4 = arith.constant 0 : index
    %6 = vector.load %arg5[%c0_3, %c0_4] : memref<8x1xf32, #tpu.memory_space<vmem>>, vector<8x1xf32>
    %c0_5 = arith.constant 0 : index
    %c0_6 = arith.constant 0 : index
    %7 = vector.load %arg6[%c0_5, %c0_6] : memref<1x8xf32, #tpu.memory_space<vmem>>, vector<1x8xf32>
    %8 = vector.broadcast %4 : vector<8x1xf32> to vector<8x8xf32>
    %9 = vector.broadcast %5 : vector<1x8xf32> to vector<8x8xf32>
    %10 = arith.subf %8, %9 : vector<8x8xf32>
    %11 = vector.broadcast %6 : vector<8x1xf32> to vector<8x8xf32>
    %12 = vector.broadcast %7 : vector<1x8xf32> to vector<8x8xf32>
    %13 = arith.cmpf ogt, %11, %12 : vector<8x8xf32>
    %14 = vector.broadcast %6 : vector<8x1xf32> to vector<8x8xf32>
    %15 = vector.broadcast %7 : vector<1x8xf32> to vector<8x8xf32>
    %16 = arith.cmpf olt, %14, %15 : vector<8x8xf32>
    %cst = arith.constant 0.000000e+00 : f32
    %cst_7 = arith.constant 5.000000e-01 : f32
    %17 = vector.broadcast %cst : f32 to vector<8x8xf32>
    %18 = vector.broadcast %cst_7 : f32 to vector<8x8xf32>
    %19 = arith.select %16, %17, %18 : vector<8x8xi1>, vector<8x8xf32>
    %cst_8 = arith.constant 1.000000e+00 : f32
    %20 = vector.broadcast %cst_8 : f32 to vector<8x8xf32>
    %21 = arith.select %13, %20, %19 : vector<8x8xi1>, vector<8x8xf32>
    %cst_9 = arith.constant 1.41421354 : f32
    %22 = vector.broadcast %cst_9 : f32 to vector<8x8xf32>
    %23 = arith.mulf %10, %22 : vector<8x8xf32>
    %24 = math.absf %23 : vector<8x8xf32>
    %cst_10 = arith.constant 0.327591091 : f32
    %25 = vector.broadcast %cst_10 : f32 to vector<8x8xf32>
    %26 = arith.mulf %25, %24 : vector<8x8xf32>
    %cst_11 = arith.constant 1.000000e+00 : f32
    %27 = vector.broadcast %cst_11 : f32 to vector<8x8xf32>
    %28 = arith.addf %27, %26 : vector<8x8xf32>
    %cst_12 = arith.constant 1.000000e+00 : f32
    %29 = vector.broadcast %cst_12 : f32 to vector<8x8xf32>
    %30 = arith.divf %29, %28 : vector<8x8xf32>
    %cst_13 = arith.constant 1.06140542 : f32
    %31 = vector.broadcast %cst_13 : f32 to vector<8x8xf32>
    %32 = arith.mulf %31, %30 : vector<8x8xf32>
    %cst_14 = arith.constant -1.45315206 : f32
    %33 = vector.broadcast %cst_14 : f32 to vector<8x8xf32>
    %34 = arith.addf %32, %33 : vector<8x8xf32>
    %35 = arith.mulf %34, %30 : vector<8x8xf32>
    %cst_15 = arith.constant 1.42141378 : f32
    %36 = vector.broadcast %cst_15 : f32 to vector<8x8xf32>
    %37 = arith.addf %35, %36 : vector<8x8xf32>
    %38 = arith.mulf %37, %30 : vector<8x8xf32>
    %cst_16 = arith.constant -0.284496725 : f32
    %39 = vector.broadcast %cst_16 : f32 to vector<8x8xf32>
    %40 = arith.addf %38, %39 : vector<8x8xf32>
    %41 = arith.mulf %40, %30 : vector<8x8xf32>
    %cst_17 = arith.constant 0.254829586 : f32
    %42 = vector.broadcast %cst_17 : f32 to vector<8x8xf32>
    %43 = arith.addf %41, %42 : vector<8x8xf32>
    %44 = arith.mulf %43, %30 : vector<8x8xf32>
    %cst_18 = arith.constant 0.000000e+00 : f32
    %45 = vector.broadcast %cst_18 : f32 to vector<8x8xf32>
    %46 = arith.subf %45, %24 : vector<8x8xf32>
    %47 = arith.mulf %46, %24 : vector<8x8xf32>
    %48 = math.exp %47 : vector<8x8xf32>
    %49 = arith.mulf %44, %48 : vector<8x8xf32>
    %cst_19 = arith.constant 1.000000e+00 : f32
    %50 = vector.broadcast %cst_19 : f32 to vector<8x8xf32>
    %51 = arith.subf %50, %49 : vector<8x8xf32>
    %cst_20 = arith.constant 0.000000e+00 : f32
    %52 = vector.broadcast %cst_20 : f32 to vector<8x8xf32>
    %53 = arith.cmpf olt, %23, %52 : vector<8x8xf32>
    %cst_21 = arith.constant 0.000000e+00 : f32
    %54 = vector.broadcast %cst_21 : f32 to vector<8x8xf32>
    %55 = arith.subf %54, %51 : vector<8x8xf32>
    %56 = arith.select %53, %55, %51 : vector<8x8xi1>, vector<8x8xf32>
    %cst_22 = arith.constant 1.000000e+00 : f32
    %57 = vector.broadcast %cst_22 : f32 to vector<8x8xf32>
    %58 = arith.addf %57, %56 : vector<8x8xf32>
    %cst_23 = arith.constant 5.000000e-01 : f32
    %59 = vector.broadcast %cst_23 : f32 to vector<8x8xf32>
    %60 = arith.mulf %59, %58 : vector<8x8xf32>
    %61 = arith.mulf %60, %21 : vector<8x8xf32>
    %cst_24 = arith.constant 9.99999993E-9 : f32
    %62 = vector.broadcast %cst_24 : f32 to vector<8x8xf32>
    %63 = arith.addf %61, %62 : vector<8x8xf32>
    %cst_25 = arith.constant 1.000000e+00 : f32
    %64 = vector.broadcast %cst_25 : f32 to vector<8x8xf32>
    %65 = arith.subf %64, %60 : vector<8x8xf32>
    %cst_26 = arith.constant 1.000000e+00 : f32
    %66 = vector.broadcast %cst_26 : f32 to vector<8x8xf32>
    %67 = arith.subf %66, %21 : vector<8x8xf32>
    %68 = arith.mulf %65, %67 : vector<8x8xf32>
    %cst_27 = arith.constant 9.99999993E-9 : f32
    %69 = vector.broadcast %cst_27 : f32 to vector<8x8xf32>
    %70 = arith.addf %68, %69 : vector<8x8xf32>
    %71 = math.rsqrt %63 : vector<8x8xf32>
    %72 = arith.mulf %63, %71 : vector<8x8xf32>
    %73 = math.rsqrt %70 : vector<8x8xf32>
    %74 = arith.mulf %70, %73 : vector<8x8xf32>
    %75 = arith.addf %72, %74 : vector<8x8xf32>
    %cst_28 = arith.constant 1.000000e+00 : f32
    %76 = vector.broadcast %cst_28 : f32 to vector<8x8xf32>
    %77 = arith.subf %76, %75 : vector<8x8xf32>
    %78 = arith.cmpi eq, %1, %3 : i32
    %79 = arith.extui %78 : i1 to i32
    %c0_i32 = arith.constant 0 : i32
    %80 = arith.cmpi ne, %79, %c0_i32 : i32
    scf.if %80 {
      %84 = vector.shape_cast %77 : vector<8x8xf32> to vector<1x8x8xf32>
      %cst_30 = arith.constant dense<0.000000e+00> : vector<1xf32>
      %85 = vector.multi_reduction <add>, %84, %cst_30 [1, 2] : vector<1x8x8xf32> to vector<1xf32>
      %86 = vector.shape_cast %85 : vector<1xf32> to vector<1x1x1xf32>
      %87 = vector.extract %86[0, 0, 0] : f32 from vector<1x1x1xf32>
      %cst_31 = arith.constant -1.600000e-07 : f32
      %88 = arith.subf %87, %cst_31 : f32
      %cst_32 = arith.constant 5.000000e-01 : f32
      %89 = arith.mulf %cst_32, %88 : f32
      %90 = vector.broadcast %89 : f32 to vector<1x8x128xf32>
      %c0_33 = arith.constant 0 : index
      %c0_34 = arith.constant 0 : index
      %c0_35 = arith.constant 0 : index
      %91 = vector.load %arg7[%c0_33, %c0_34, %c0_35] : memref<1x8x128xf32, #tpu.memory_space<vmem>>, vector<1x8x128xf32>
      tpu.vector_store %arg7[%c0_33, %c0_34, %c0_35], %90 {strides = array<i32>} : memref<1x8x128xf32, #tpu.memory_space<vmem>>, vector<1x8x128xf32>,
    } else {
    }
    %true = arith.constant true
    %81 = arith.xori %78, %true : i1
    %82 = arith.extui %81 : i1 to i32
    %c0_i32_29 = arith.constant 0 : i32
    %83 = arith.cmpi ne, %82, %c0_i32_29 : i32
    scf.if %83 {
      %84 = vector.shape_cast %77 : vector<8x8xf32> to vector<1x8x8xf32>
      %cst_30 = arith.constant dense<0.000000e+00> : vector<1xf32>
      %85 = vector.multi_reduction <add>, %84, %cst_30 [1, 2] : vector<1x8x8xf32> to vector<1xf32>
      %86 = vector.shape_cast %85 : vector<1xf32> to vector<1x1x1xf32>
      %87 = vector.extract %86[0, 0, 0] : f32 from vector<1x1x1xf32>
      %88 = vector.broadcast %87 : f32 to vector<1x8x128xf32>
      %c0_31 = arith.constant 0 : index
      %c0_32 = arith.constant 0 : index
      %c0_33 = arith.constant 0 : index
      %89 = vector.load %arg7[%c0_31, %c0_32, %c0_33] : memref<1x8x128xf32, #tpu.memory_space<vmem>>, vector<1x8x128xf32>
      tpu.vector_store %arg7[%c0_31, %c0_32, %c0_33], %88 {strides = array<i32>} : memref<1x8x128xf32, #tpu.memory_space<vmem>>, vector<1x8x128xf32>,
    } else {
    }
    return
  }
  func.func @transform_0(%arg0: i32, %arg1: memref<1xi32, #tpu.memory_space<smem>>, %arg2: memref<1xi32, #tpu.memory_space<smem>>) -> (i32, i32) {
    %0 = arith.index_cast %arg0 : i32 to index
    %1 = memref.load %arg1[%0] : memref<1xi32, #tpu.memory_space<smem>>
    %c0_i32 = arith.constant 0 : i32
    %c0_i32_0 = arith.constant 0 : i32
    return %1, %c0_i32 : i32, i32
  }
  func.func @transform_1(%arg0: i32, %arg1: memref<1xi32, #tpu.memory_space<smem>>, %arg2: memref<1xi32, #tpu.memory_space<smem>>) -> (i32, i32) {
    %0 = arith.index_cast %arg0 : i32 to index
    %1 = memref.load %arg2[%0] : memref<1xi32, #tpu.memory_space<smem>>
    %c0_i32 = arith.constant 0 : i32
    %c0_i32_0 = arith.constant 0 : i32
    return %c0_i32, %1 : i32, i32
  }
  func.func @transform_2(%arg0: i32, %arg1: memref<1xi32, #tpu.memory_space<smem>>, %arg2: memref<1xi32, #tpu.memory_space<smem>>) -> (i32, i32) {
    %0 = arith.index_cast %arg0 : i32 to index
    %1 = memref.load %arg1[%0] : memref<1xi32, #tpu.memory_space<smem>>
    %c0_i32 = arith.constant 0 : i32
    %c0_i32_0 = arith.constant 0 : i32
    return %1, %c0_i32 : i32, i32
  }
  func.func @transform_3(%arg0: i32, %arg1: memref<1xi32, #tpu.memory_space<smem>>, %arg2: memref<1xi32, #tpu.memory_space<smem>>) -> (i32, i32) {
    %0 = arith.index_cast %arg0 : i32 to index
    %1 = memref.load %arg2[%0] : memref<1xi32, #tpu.memory_space<smem>>
    %c0_i32 = arith.constant 0 : i32
    %c0_i32_0 = arith.constant 0 : i32
    return %c0_i32, %1 : i32, i32
  }
  func.func @transform_4(%arg0: i32, %arg1: memref<1xi32, #tpu.memory_space<smem>>, %arg2: memref<1xi32, #tpu.memory_space<smem>>) -> (i32, i32, i32) {
    %c0_i32 = arith.constant 0 : i32
    %c0_i32_0 = arith.constant 0 : i32
    %c0_i32_1 = arith.constant 0 : i32
    return %arg0, %c0_i32, %c0_i32_0 : i32, i32, i32
  }
}

</mosaic_0001>

<llo_original>
// kernel: tpu_custom_call.1
$region0: #{tpu_custom_call.1}
  #allocation0 [shape = 'u32[]', space=smem, size = 0x4, offset = 0x4, fixed_abs, tag = 'smem constant byte address 0x4 - core index']
  #allocation1 [shape = 'u32[144,128]{1,0:T(1,128)}', space=vmem, size = 0x12000, scoped, tag = 'internal scratch']
  #allocation2 [shape = 's32[1]{0}', space=sflag, size = 0x4, scoped, tag = 'scoped memory for tpu_custom_call.1']
  #allocation3 [shape = 's32[1]{0:T(128)S(6)}', space=smem, size = 0x200, scoped, tag = 'prefetched SMEM operand 0']
  #allocation4 [shape = 's32[1]{0:T(128)S(6)}', space=smem, size = 0x200, scoped, tag = 'prefetched SMEM operand 1']
  %s0 = inlined_call_operand.<no memory space> [shape: s32[1], index: 0, kind: input, shape index: {}]
  %s1 = inlined_call_operand.<no memory space> [shape: s32[1], index: 1, kind: input, shape index: {}]
  %s2 = inlined_call_operand.vmem [shape: f32[8,1], index: 2, kind: input, shape index: {}]
  %s3 = inlined_call_operand.vmem [shape: f32[1,8], index: 3, kind: input, shape index: {}]
  %s4 = inlined_call_operand.vmem [shape: f32[8,1], index: 4, kind: input, shape index: {}]
  %s5 = inlined_call_operand.vmem [shape: f32[1,8], index: 5, kind: input, shape index: {}]
  %s6 = inlined_call_operand.hbm [shape: f32[1,8,128], index: 6, kind: output, shape index: {}]
  %s7 = sld [smem:[#allocation0]]
  $region34: #{tpu_custom_call.1} parent=0
    _
  %s9 = ssub.s32 1, %s7
  %s10 = scalar_select 0, %s9, %s7
  %11 = sst [smem:[#allocation3]] %s0
  %12 = sst [smem:[#allocation4]] %s1
  $region1: #{tpu_custom_call.1} parent=0
    #allocation5 [shape = 'u8[4096]{0}', space=vmem, size = 0x1000, scoped, tag = 'output window, operand 0, single buffered']
    #allocation6 [shape = 's32[1]{0}', space=sflag, size = 0x4, scoped, tag = 'scoped memory for tpu_custom_call.1']
    %13 = vsyncpa [#allocation6], 0
    // Predicated region
    $region2: #{tpu_custom_call.1} parent=1 // pred_check
      _
    $region3: #{tpu_custom_call.1} parent=1 // pred_check_branch
      %15 = sbr.rel (0) target = $region5
    $region4: #{tpu_custom_call.1} parent=1 // pred_region
      %s16 = sld [smem:[#allocation3]]
      %p17 = scmp.lt.s32.totalorder %s16, 0
      %s18 = scalar_select %p17, %s16, 0
      %s19 = smul.addr %s18, 8
      %s20 = scalar_lea.vmem %s2, %s19
      %s21 = sld [smem:[#allocation3]]
    $region5: #{tpu_custom_call.1} parent=1 // pred_fallthru
      _
    // Predicated region
    $region6: #{tpu_custom_call.1} parent=1 // pred_check
      _
    $region7: #{tpu_custom_call.1} parent=1 // pred_check_branch
      %23 = sbr.rel (0) target = $region9
    $region8: #{tpu_custom_call.1} parent=1 // pred_region
      %s24 = sld [smem:[#allocation4]]
      %p25 = scmp.lt.s32.totalorder %s24, 0
      %s26 = scalar_select %p25, %s24, 0
      %s27 = scalar_lea.vmem %s3, %s26
      %s28 = sld [smem:[#allocation4]]
    $region9: #{tpu_custom_call.1} parent=1 // pred_fallthru
      _
    // Predicated region
    $region10: #{tpu_custom_call.1} parent=1 // pred_check
      _
    $region11: #{tpu_custom_call.1} parent=1 // pred_check_branch
      %30 = sbr.rel (0) target = $region13
    $region12: #{tpu_custom_call.1} parent=1 // pred_region
      %s31 = sld [smem:[#allocation3]]
      %p32 = scmp.lt.s32.totalorder %s31, 0
      %s33 = scalar_select %p32, %s31, 0
      %s34 = smul.addr %s33, 8
      %s35 = scalar_lea.vmem %s4, %s34
      %s36 = sld [smem:[#allocation3]]
    $region13: #{tpu_custom_call.1} parent=1 // pred_fallthru
      _
    // Predicated region
    $region14: #{tpu_custom_call.1} parent=1 // pred_check
      _
    $region15: #{tpu_custom_call.1} parent=1 // pred_check_branch
      %38 = sbr.rel (0) target = $region17
    $region16: #{tpu_custom_call.1} parent=1 // pred_region
      %s39 = sld [smem:[#allocation4]]
      %p40 = scmp.lt.s32.totalorder %s39, 0
      %s41 = scalar_select %p40, %s39, 0
      %s42 = scalar_lea.vmem %s5, %s41
      %s43 = sld [smem:[#allocation4]]
    $region17: #{tpu_custom_call.1} parent=1 // pred_fallthru
      _
    %s44 = sld [smem:[#allocation3]]
    %p45 = scmp.lt.s32.totalorder %s44, 0
    %s46 = scalar_select %p45, %s44, 0
    %s47 = smul.addr %s46, 8
    %s48 = scalar_lea.vmem %s2, %s47
    %s49 = sld [smem:[#allocation4]]
    %p50 = scmp.lt.s32.totalorder %s49, 0
    %s51 = scalar_select %p50, %s49, 0
    %s52 = scalar_lea.vmem %s3, %s51
    %s53 = sld [smem:[#allocation3]]
    %p54 = scmp.lt.s32.totalorder %s53, 0
    %s55 = scalar_select %p54, %s53, 0
    %s56 = smul.addr %s55, 8
    %s57 = scalar_lea.vmem %s4, %s56
    %s58 = sld [smem:[#allocation4]]
    %p59 = scmp.lt.s32.totalorder %s58, 0
    %s60 = scalar_select %p59, %s58, 0
    %s61 = scalar_lea.vmem %s5, %s60
    %s62 = sld [smem:[#allocation3]]
    %p63 = scmp.lt.s32.totalorder %s62, 0
    %s64 = scalar_select %p63, %s62, 0
    %s65 = smul.addr %s64, 8
    %s66 = scalar_lea.vmem %s2, %s65
    %s67 = sld [smem:[#allocation3]]
    %s68 = sld [smem:[#allocation4]]
    %p69 = scmp.lt.s32.totalorder %s68, 0
    %s70 = scalar_select %p69, %s68, 0
    %s71 = scalar_lea.vmem %s3, %s70
    %s72 = sld [smem:[#allocation4]]
    %s73 = sld [smem:[#allocation3]]
    %p74 = scmp.lt.s32.totalorder %s73, 0
    %s75 = scalar_select %p74, %s73, 0
    %s76 = smul.addr %s75, 8
    %s77 = scalar_lea.vmem %s4, %s76
    %s78 = sld [smem:[#allocation3]]
    %s79 = sld [smem:[#allocation4]]
    %p80 = scmp.lt.s32.totalorder %s79, 0
    %s81 = scalar_select %p80, %s79, 0
    %s82 = scalar_lea.vmem %s5, %s81
    %s83 = sld [smem:[#allocation4]]
    %s84 = sld [smem:[#allocation3]]
    %s85 = sld [smem:[#allocation4]]
    %v86 = vld [vmem:[%s66] sm:$0xff]
    %v87 = vld [vmem:[%s71] sm:$0x1]
    %v88 = vld [vmem:[%s77] sm:$0xff]
    %v89 = vld [vmem:[%s82] sm:$0x1]
    %91 = vset.pattern.permute.xlu0 0
    %92 = vperm.xlu0 %91, %v86
    %v93 = vpop.permute.xlu0 %92
    %v96 = vlaneseq
    %v97 = vshrl.u32 %v96, 7
    %v98 = vsub.s32 0, %v97
    %v99 = vrot.slane %v87, %v98
    %v101 = vsub.f32 %v93, %v99
    %103 = vset.pattern.permute.xlu0 0
    %104 = vperm.xlu0 %103, %v88
    %v105 = vpop.permute.xlu0 %104
    %v108 = vlaneseq
    %v109 = vshrl.u32 %v108, 7
    %v110 = vsub.s32 0, %v109
    %v111 = vrot.slane %v89, %v110
    %vm113 = vcmp.gt.f32.partialorder %v105, %v111
    %vm114 = vcmp.lt.f32.partialorder %v105, %v111
    %v115 = vsel %vm114, 0.0, 0.5
    %v116 = vsel %vm113, 1.0, %v115
    %v117 = vmul.f32 %v101, 1.4142135
    %v118 = vand.u32 2147483647, %v117
    %v119 = vmul.f32 %v118, 0.3275911
    %v120 = vadd.f32 %v119, 1.0
    %v121 = vrcp.pop %v120
    %v122 = vmul.f32 1.0, %v121
    %v123 = vmul.f32 %v122, 1.0614054
    %v124 = vadd.f32 %v123, -1.4531521
    %v125 = vmul.f32 %v124, %v122
    %v126 = vadd.f32 %v125, 1.4214138
    %v127 = vmul.f32 %v126, %v122
    %v128 = vadd.f32 %v127, -0.28449672
    %v129 = vmul.f32 %v128, %v122
    %v130 = vadd.f32 %v129, 0.2548296
    %v131 = vmul.f32 %v130, %v122
    %v132 = vsub.f32 0.0, %v118
    %v133 = vmul.f32 %v132, %v118
    %v134 = vmul.f32 %v133, 1.442695
    %v135 = vpow.pop %v134
    %v136 = vmul.f32 %v131, %v135
    %v137 = vsub.f32 1.0, %v136
    %vm138 = vcmp.lt.f32.partialorder %v117, 0.0
    %v139 = vsub.f32 0.0, %v137
    %v140 = vsel %vm138, %v139, %v137
    %v141 = vadd.f32 %v140, 1.0
    %v142 = vmul.f32 %v141, 0.5
    %v143 = vmul.f32 %v142, %v116
    %v144 = vadd.f32 %v143, 1e-08
    %v145 = vsub.f32 1.0, %v142
    %v146 = vsub.f32 1.0, %v116
    %v147 = vmul.f32 %v145, %v146
    %v148 = vadd.f32 %v147, 1e-08
    %v149 = vrsqrt.pop %v144
    %v150 = vmul.f32 %v144, %v149
    %v151 = vrsqrt.pop %v148
    %v152 = vmul.f32 %v148, %v151
    %v153 = vadd.f32 %v150, %v152
    %v154 = vsub.f32 1.0, %v153
    %p155 = scmp.eq.s32.totalorder %s84, %s85
    // Predicated region
    $region18: #{tpu_custom_call.1} parent=1 // pred_check
      %p156 = pneg %p155
    $region19: #{tpu_custom_call.1} parent=1 // pred_check_branch
      %158 = sbr.rel (%p156) target = $region21
    $region20: #{tpu_custom_call.1} parent=1 // pred_region
      %vm159 = vcmask 64512
      %v160 = vsel %vm159, %v154, 0.0
      %161 = vadd.xlane.f32.xlu0 %v160
      %v162 = vpop.xlane.xlu0 %161
      %v163 = vrot.slane %v162, 4
      %v164 = vadd.f32 %v162, %v163
      %v165 = vrot.slane %v164, 2
      %v166 = vadd.f32 %v164, %v165
      %v167 = vrot.slane %v166, 1
      %v168 = vadd.f32 %v166, %v167
      %s169 = vtos %v168
      %s170 = ssub.f32 %s169, -1.6e-07
      %s171 = smul.f32 %s170, 0.5
      %v172 = vstv %s171
      %173 = vst [vmem:[#allocation5] sm:$0xff] %v172
    $region21: #{tpu_custom_call.1} parent=1 // pred_fallthru
      _
    %p174 = scmp.ne.s32.totalorder %s84, %s85
    // Predicated region
    $region22: #{tpu_custom_call.1} parent=1 // pred_check
      %p175 = pneg %p174
    $region23: #{tpu_custom_call.1} parent=1 // pred_check_branch
      %177 = sbr.rel (%p175) target = $region25
    $region24: #{tpu_custom_call.1} parent=1 // pred_region
      %vm178 = vcmask 64512
      %v179 = vsel %vm178, %v154, 0.0
      %180 = vadd.xlane.f32.xlu0 %v179
      %v181 = vpop.xlane.xlu0 %180
      %v182 = vrot.slane %v181, 4
      %v183 = vadd.f32 %v181, %v182
      %v184 = vrot.slane %v183, 2
      %v185 = vadd.f32 %v183, %v184
      %v186 = vrot.slane %v185, 1
      %v187 = vadd.f32 %v185, %v186
      %s188 = vtos %v187
      %v189 = vstv %s188
      %190 = vst [vmem:[#allocation5] sm:$0xff] %v189
    $region25: #{tpu_custom_call.1} parent=1 // pred_fallthru
      _
    // Predicated region
    $region26: #{tpu_custom_call.1} parent=1 // pred_check
      _
    $region27: #{tpu_custom_call.1} parent=1 // pred_check_branch
      %192 = sbr.rel (0) target = $region29
    $region28: #{tpu_custom_call.1} parent=1 // pred_region
      %s194 = ssub.s32 128, 128
      %195 = vsyncadd [#allocation6], %s194
      %s197 = sshll.u32 [#allocation5], 4
      %s198 = int_to_ptr.vmem [resolvable:$true] %s197
      %200 = dma.vmem_to_hbm [thread:$0]  %s198, 128, %s6, [#allocation6]
    $region29: #{tpu_custom_call.1} parent=1 // pred_fallthru
      _
    // Predicated region
    $region30: #{tpu_custom_call.1} parent=1 // pred_check
      _
    $region31: #{tpu_custom_call.1} parent=1 // pred_check_branch
      %202 = sbr.rel (0) target = $region33
    $region32: #{tpu_custom_call.1} parent=1 // pred_region
      %203 = dma.done [#allocation6], 128
    $region33: #{tpu_custom_call.1} parent=1 // pred_fallthru
      _
    %204 = vsyncpa [#allocation6], 1

</llo_original>
